<compile_context>
chip_gen: v7x
topology: tpu7x:2x2x1
jax: 0.10.0
libtpu: 0.0.40
codegen_flags: <defaults>
</compile_context>

<pallas_src>
import functools

import jax
import jax.numpy as jnp
from jax.experimental import pallas as pl
from jax.experimental.pallas import tpu as pltpu

APP_LSD = 32          # synthetic const.APP_LSD
IN_DIM = 2 * APP_LSD  # 64
H1 = 100
H2 = 50
OUT_DIM = APP_LSD     # 32
NEG_SLOPE = 0.01      # PyTorch F.leaky_relu default negative_slope

LANES = 128

# Packed parameter slab layout: one (P_ROWS, 128) bf16 array.
# All row offsets are multiples of 16 so slices stay aligned to bf16 (16, 128) tiles.
W1_OFF, W1_ROWS = 0, IN_DIM      # rows   0.. 63 : w1, out dim padded 100->128
W2_OFF, W2_ROWS = 64, LANES      # rows  64..191 : w2, 100->128 rows, 50->128 lanes
W3_OFF, W3_ROWS = 192, LANES     # rows 192..319 : w3,  50->128 rows, 32->128 lanes
B1_OFF = 320                     # row 320 : b1 (padded to 128 lanes)
B2_OFF = 336                     # row 336 : b2
B3_OFF = 352                     # row 352 : b3
P_ROWS = 368                     # multiple of 16


def _leaky_relu(x):
    # max(x, 0.01*x) == PyTorch leaky_relu for slope < 1 (single VALU op).
    return jnp.maximum(x, NEG_SLOPE * x)


def observation_mlp_kernel(x_ref, p_ref, o_ref):
    # Activations arrive f32; matmul operands are bf16, accumulation f32 (MXU native).
    x = x_ref[...].astype(jnp.bfloat16)                # (TB, 64) bf16

    w1 = p_ref[pl.ds(W1_OFF, W1_ROWS), :]              # (64, 128)  bf16
    w2 = p_ref[pl.ds(W2_OFF, W2_ROWS), :]              # (128, 128) bf16
    w3 = p_ref[pl.ds(W3_OFF, W3_ROWS), :]              # (128, 128) bf16
    b1 = p_ref[pl.ds(B1_OFF, 1), :].astype(jnp.float32)  # (1, 128)
    b2 = p_ref[pl.ds(B2_OFF, 1), :].astype(jnp.float32)
    b3 = p_ref[pl.ds(B3_OFF, 1), :].astype(jnp.float32)

    h = jnp.dot(x, w1, preferred_element_type=jnp.float32) + b1     # (TB, 128) f32
    h = _leaky_relu(h)
    h = jnp.dot(h.astype(jnp.bfloat16), w2,
                preferred_element_type=jnp.float32) + b2            # (TB, 128) f32
    h = _leaky_relu(h)
    h = jnp.dot(h.astype(jnp.bfloat16), w3,
                preferred_element_type=jnp.float32) + b3            # (TB, 128) f32

    logits = h[:, :OUT_DIM]                                         # (TB, 32)
    # sigmoid(x) == 0.5*tanh(0.5*x) + 0.5 : one EUP op, exact, only on real lanes.
    o_ref[...] = 0.5 * jnp.tanh(0.5 * logits) + 0.5


def pack_params(params):
    """Pack (w1,b1,w2,b2,w3,b3) into one zero-padded (P_ROWS, 128) bf16 slab.

    Weights are (in_dim, out_dim) (transposed vs. PyTorch), biases (1, out_dim).
    """
    w1, b1, w2, b2, w3, b3 = params
    slab = jnp.zeros((P_ROWS, LANES), jnp.bfloat16)
    slab = slab.at[W1_OFF:W1_OFF + IN_DIM, :H1].set(w1.astype(jnp.bfloat16))
    slab = slab.at[W2_OFF:W2_OFF + H1, :H2].set(w2.astype(jnp.bfloat16))
    slab = slab.at[W3_OFF:W3_OFF + H2, :OUT_DIM].set(w3.astype(jnp.bfloat16))
    slab = slab.at[B1_OFF:B1_OFF + 1, :H1].set(b1.astype(jnp.bfloat16))
    slab = slab.at[B2_OFF:B2_OFF + 1, :H2].set(b2.astype(jnp.bfloat16))
    slab = slab.at[B3_OFF:B3_OFF + 1, :OUT_DIM].set(b3.astype(jnp.bfloat16))
    return slab


def _round_up(x, m):
    return (x + m - 1) // m * m


@functools.partial(jax.jit, static_argnames=("tile_b",))
def observation_module(w, packed_params, *, tile_b=2048):
    """w: (B, 2*APP_LSD) f32, packed_params: (P_ROWS, 128) bf16 -> (B, APP_LSD) f32."""
    B = w.shape[0]
    # Batch tile: big enough to amortize per-step overhead, but capped at ceil(B/2)
    # (rounded to 8) so the grid has >= 2 steps and both v7x TensorCores get work.
    TB = max(8, min(tile_b, _round_up((B + 1) // 2, 8)))
    Bp = _round_up(B, TB)
    if Bp != B:
        w = jnp.pad(w, ((0, Bp - B), (0, 0)))
    num_tiles = Bp // TB

    cost = pl.CostEstimate(
        flops=2 * Bp * (IN_DIM * LANES + LANES * LANES + LANES * LANES),
        transcendentals=Bp * OUT_DIM,
        bytes_accessed=Bp * IN_DIM * 4 + Bp * OUT_DIM * 4 + P_ROWS * LANES * 2,
    )

    out_padded = pl.pallas_call(
        observation_mlp_kernel,
        out_shape=jax.ShapeDtypeStruct((Bp, OUT_DIM), jnp.float32),
        grid_spec=pltpu.PrefetchScalarGridSpec(
            num_scalar_prefetch=0,
            grid=(num_tiles,),
            in_specs=[
                pl.BlockSpec((TB, IN_DIM), lambda i: (i, 0)),       # activations
                pl.BlockSpec((P_ROWS, LANES), lambda i: (0, 0)),    # params, resident
            ],
            out_specs=pl.BlockSpec((TB, OUT_DIM), lambda i: (i, 0)),
        ),
        compiler_params=pltpu.CompilerParams(
            dimension_semantics=("parallel",),
        ),
        cost_estimate=cost,
    )(w, packed_params)

    return out_padded[:B]


def init_params(key):
    """Deterministic synthetic params. Weights as (in_dim, out_dim); biases (1, out_dim)."""
    k1, k2, k3, k4, k5, k6 = jax.random.split(key, 6)

    def uinit(k, fan_in, shape):
        bound = 1.0 / (fan_in ** 0.5)
        return jax.random.uniform(k, shape, jnp.float32, -bound, bound)

    w1 = uinit(k1, IN_DIM, (IN_DIM, H1))
    b1 = uinit(k2, IN_DIM, (1, H1))
    w2 = uinit(k3, H1, (H1, H2))
    b2 = uinit(k4, H1, (1, H2))
    w3 = uinit(k5, H2, (H2, OUT_DIM))
    b3 = uinit(k6, H2, (1, OUT_DIM))
    return (w1, b1, w2, b2, w3, b3)


def reference(w, params):
    """Pure-JAX f32 reference of the PyTorch forward."""
    w1, b1, w2, b2, w3, b3 = params
    h = w @ w1 + b1
    h = jnp.maximum(h, NEG_SLOPE * h)
    h = h @ w2 + b2
    h = jnp.maximum(h, NEG_SLOPE * h)
    return jax.nn.sigmoid(h @ w3 + b3)


if __name__ == "__main__":
    key = jax.random.PRNGKey(0)
    kp, kx1, kx2 = jax.random.split(key, 3)
    params = init_params(kp)
    slab = pack_params(params)

    # Small demo batch.
    B = 8
    w = jax.random.normal(kx1, (B, IN_DIM), jnp.float32)
    out = jax.block_until_ready(observation_module(w, slab))
    ref = reference(w, params)
    assert out.shape == (B, OUT_DIM)
    err = float(jnp.max(jnp.abs(out - ref)))
    # bf16 matmul operands (f32 accumulation) -> relaxed tolerance vs. f32 reference.
    assert err < 2e-2, err

    # Larger batch exercising the batch grid (>= 2 tiles) + padding path.
    B2 = 300
    w2 = jax.random.normal(kx2, (B2, IN_DIM), jnp.float32)
    out2 = jax.block_until_ready(observation_module(w2, slab, tile_b=128))
    ref2 = reference(w2, params)
    assert out2.shape == (B2, OUT_DIM)
    err2 = float(jnp.max(jnp.abs(out2 - ref2)))
    assert err2 < 2e-2, err2

    print("KERNEL_OK")
</pallas_src>

<mosaic_0001>
module attributes {stable_mosaic.version = 11 : i64} {
  func.func @observation_mlp_kernel(%arg0: i32, %arg1: memref<8x64xf32, #tpu.memory_space<vmem>>, %arg2: memref<368x128xbf16, #tpu.memory_space<vmem>>, %arg3: memref<8x32xf32, #tpu.memory_space<vmem>>) attributes {dimension_semantics = [#tpu.dimension_semantics<parallel>], iteration_bounds = array<i64: 1>, scalar_prefetch = 0 : i64, scratch_operands = 0 : i64, tpu.core_type = #tpu.core_type<tc>, window_params = [{transform_indices = @transform_0, window_bounds = array<i64: 8, 64>}, {pipeline_mode = #tpu.pipeline_mode<synchronous>, transform_indices = @transform_1, window_bounds = array<i64: 368, 128>}, {transform_indices = @transform_2, window_bounds = array<i64: 8, 32>}]} {
    %c0 = arith.constant 0 : index
    %c0_0 = arith.constant 0 : index
    %0 = vector.load %arg1[%c0, %c0_0] : memref<8x64xf32, #tpu.memory_space<vmem>>, vector<8x64xf32>
    %1 = arith.truncf %0 : vector<8x64xf32> to vector<8x64xbf16>
    %c0_1 = arith.constant 0 : index
    %c0_2 = arith.constant 0 : index
    %2 = vector.load %arg2[%c0_1, %c0_2] : memref<368x128xbf16, #tpu.memory_space<vmem>>, vector<64x128xbf16>
    %c64 = arith.constant 64 : index
    %c0_3 = arith.constant 0 : index
    %3 = vector.load %arg2[%c64, %c0_3] : memref<368x128xbf16, #tpu.memory_space<vmem>>, vector<128x128xbf16>
    %c192 = arith.constant 192 : index
    %c0_4 = arith.constant 0 : index
    %4 = vector.load %arg2[%c192, %c0_4] : memref<368x128xbf16, #tpu.memory_space<vmem>>, vector<128x128xbf16>
    %c320 = arith.constant 320 : index
    %c0_5 = arith.constant 0 : index
    %5 = vector.load %arg2[%c320, %c0_5] : memref<368x128xbf16, #tpu.memory_space<vmem>>, vector<1x128xbf16>
    %6 = arith.extf %5 : vector<1x128xbf16> to vector<1x128xf32>
    %c336 = arith.constant 336 : index
    %c0_6 = arith.constant 0 : index
    %7 = vector.load %arg2[%c336, %c0_6] : memref<368x128xbf16, #tpu.memory_space<vmem>>, vector<1x128xbf16>
    %8 = arith.extf %7 : vector<1x128xbf16> to vector<1x128xf32>
    %c352 = arith.constant 352 : index
    %c0_7 = arith.constant 0 : index
    %9 = vector.load %arg2[%c352, %c0_7] : memref<368x128xbf16, #tpu.memory_space<vmem>>, vector<1x128xbf16>
    %10 = arith.extf %9 : vector<1x128xbf16> to vector<1x128xf32>
    %cst = arith.constant dense<0.000000e+00> : vector<8x128xf32>
    %11 = tpu.matmul %1, %2, %cst {dimension_numbers = #tpu.dot_dimension_numbers<[1], [0], [0], [1], [0, 0, 1, 1], [], []>} : vector<8x64xbf16>, vector<64x128xbf16>, vector<8x128xf32> -> vector<8x128xf32>
    %12 = vector.broadcast %6 : vector<1x128xf32> to vector<8x128xf32>
    %13 = arith.addf %11, %12 : vector<8x128xf32>
    %cst_8 = arith.constant 0.00999999977 : f32
    %14 = vector.broadcast %cst_8 : f32 to vector<8x128xf32>
    %15 = arith.mulf %14, %13 : vector<8x128xf32>
    %16 = arith.maximumf %13, %15 : vector<8x128xf32>
    %17 = arith.truncf %16 : vector<8x128xf32> to vector<8x128xbf16>
    %cst_9 = arith.constant dense<0.000000e+00> : vector<8x128xf32>
    %18 = tpu.matmul %17, %3, %cst_9 {dimension_numbers = #tpu.dot_dimension_numbers<[1], [0], [0], [1], [0, 0, 1, 1], [], []>} : vector<8x128xbf16>, vector<128x128xbf16>, vector<8x128xf32> -> vector<8x128xf32>
    %19 = vector.broadcast %8 : vector<1x128xf32> to vector<8x128xf32>
    %20 = arith.addf %18, %19 : vector<8x128xf32>
    %cst_10 = arith.constant 0.00999999977 : f32
    %21 = vector.broadcast %cst_10 : f32 to vector<8x128xf32>
    %22 = arith.mulf %21, %20 : vector<8x128xf32>
    %23 = arith.maximumf %20, %22 : vector<8x128xf32>
    %24 = arith.truncf %23 : vector<8x128xf32> to vector<8x128xbf16>
    %cst_11 = arith.constant dense<0.000000e+00> : vector<8x128xf32>
    %25 = tpu.matmul %24, %4, %cst_11 {dimension_numbers = #tpu.dot_dimension_numbers<[1], [0], [0], [1], [0, 0, 1, 1], [], []>} : vector<8x128xbf16>, vector<128x128xbf16>, vector<8x128xf32> -> vector<8x128xf32>
    %26 = vector.broadcast %10 : vector<1x128xf32> to vector<8x128xf32>
    %27 = arith.addf %25, %26 : vector<8x128xf32>
    %28 = vector.extract_strided_slice %27 {offsets = [0, 0], sizes = [8, 32], strides = [1, 1]} : vector<8x128xf32> to vector<8x32xf32>
    %cst_12 = arith.constant 5.000000e-01 : f32
    %29 = vector.broadcast %cst_12 : f32 to vector<8x32xf32>
    %30 = arith.mulf %29, %28 : vector<8x32xf32>
    %31 = math.tanh %30 : vector<8x32xf32>
    %cst_13 = arith.constant 5.000000e-01 : f32
    %32 = vector.broadcast %cst_13 : f32 to vector<8x32xf32>
    %33 = arith.mulf %32, %31 : vector<8x32xf32>
    %cst_14 = arith.constant 5.000000e-01 : f32
    %34 = vector.broadcast %cst_14 : f32 to vector<8x32xf32>
    %35 = arith.addf %33, %34 : vector<8x32xf32>
    %c0_15 = arith.constant 0 : index
    %c0_16 = arith.constant 0 : index
    %36 = vector.load %arg3[%c0_15, %c0_16] : memref<8x32xf32, #tpu.memory_space<vmem>>, vector<8x32xf32>
    tpu.vector_store %arg3[%c0_15, %c0_16], %35 {strides = array<i32>} : memref<8x32xf32, #tpu.memory_space<vmem>>, vector<8x32xf32>,
    return
  }
  func.func @transform_0(%arg0: i32) -> (i32, i32) {
    %c0_i32 = arith.constant 0 : i32
    %c0_i32_0 = arith.constant 0 : i32
    return %arg0, %c0_i32 : i32, i32
  }
  func.func @transform_1(%arg0: i32) -> (i32, i32) {
    %c0_i32 = arith.constant 0 : i32
    %c0_i32_0 = arith.constant 0 : i32
    %c0_i32_1 = arith.constant 0 : i32
    return %c0_i32, %c0_i32_0 : i32, i32
  }
  func.func @transform_2(%arg0: i32) -> (i32, i32) {
    %c0_i32 = arith.constant 0 : i32
    %c0_i32_0 = arith.constant 0 : i32
    return %arg0, %c0_i32 : i32, i32
  }
}

</mosaic_0001>

<llo_original>
// kernel: observation_module.1
$region0: #{observation_module.1}
  #allocation0 [shape = 'u32[]', space=smem, size = 0x4, offset = 0x4, fixed_abs, tag = 'smem constant byte address 0x4 - core index']
  #allocation1 [shape = 'u32[144,128]{1,0:T(1,128)}', space=vmem, size = 0x12000, scoped, tag = 'internal scratch']
  %s0 = inlined_call_operand.hbm [shape: f32[8,64], index: 0, kind: input, shape index: {}]
  %s1 = inlined_call_operand.hbm [shape: bf16[368,128], index: 1, kind: input, shape index: {}]
  %s2 = inlined_call_operand.hbm [shape: f32[8,32], index: 2, kind: output, shape index: {}]
  %s3 = sld [smem:[#allocation0]]
  $region26: #{observation_module.1} parent=0
    _
  %s5 = ssub.s32 1, %s3
  %s6 = scalar_select 0, %s5, %s3
  $region1: #{observation_module.1} parent=0
    #allocation2 [shape = 'u8[4096]{0}', space=vmem, size = 0x1000, scoped, tag = 'input window, operand 0, single buffered']
    #allocation3 [shape = 's32[1]{0}', space=sflag, size = 0x4, scoped, tag = 'scoped memory for observation_module.1']
    #allocation4 [shape = 's32[1]{0}', space=sflag, size = 0x4, scoped, tag = 'scoped memory for observation_module.1']
    #allocation5 [shape = 'u8[94208]{0}', space=vmem, size = 0x17000, scoped, tag = 'input window, operand 1, single buffered']
    #allocation6 [shape = 's32[1]{0}', space=sflag, size = 0x4, scoped, tag = 'scoped memory for observation_module.1']
    #allocation7 [shape = 'u8[4096]{0}', space=vmem, size = 0x1000, scoped, tag = 'output window, operand 0, single buffered']
    %7 = vsyncpa [#allocation3], 0
    %8 = vsyncpa [#allocation6], 0
    %9 = vsyncpa [#allocation4], 0
    // Predicated region
    $region2: #{observation_module.1} parent=1 // pred_check
      _
    $region3: #{observation_module.1} parent=1 // pred_check_branch
      %11 = sbr.rel (0) target = $region5
    $region4: #{observation_module.1} parent=1 // pred_region
      %s13 = ssub.s32 128, 128
      %14 = vsyncadd [#allocation3], %s13
      %s16 = sshll.u32 [#allocation2], 4
      %s17 = int_to_ptr.vmem [resolvable:$true] %s16
      %19 = dma.hbm_to_vmem [thread:$0]  %s0, 128, %s17, [#allocation3]
    $region5: #{observation_module.1} parent=1 // pred_fallthru
      _
    // Predicated region
    $region6: #{observation_module.1} parent=1 // pred_check
      _
    $region7: #{observation_module.1} parent=1 // pred_check_branch
      %21 = sbr.rel (0) target = $region9
    $region8: #{observation_module.1} parent=1 // pred_region
      %s23 = ssub.s32 2944, 2944
      %24 = vsyncadd [#allocation6], %s23
      %s25 = sshll.u32 [#allocation5], 4
      %s26 = int_to_ptr.vmem [resolvable:$true] %s25
      %31 = dma.hbm_to_vmem [thread:$0]  %s1, 2944, %s26, [#allocation6], 64, 64, 4
    $region9: #{observation_module.1} parent=1 // pred_fallthru
      _
    // Predicated region
    $region10: #{observation_module.1} parent=1 // pred_check
      _
    $region11: #{observation_module.1} parent=1 // pred_check_branch
      %33 = sbr.rel (0) target = $region13
    $region12: #{observation_module.1} parent=1 // pred_region
      %34 = dma.done [#allocation3], 128
    $region13: #{observation_module.1} parent=1 // pred_fallthru
      _
    // Predicated region
    $region14: #{observation_module.1} parent=1 // pred_check
      _
    $region15: #{observation_module.1} parent=1 // pred_check_branch
      %36 = sbr.rel (0) target = $region17
    $region16: #{observation_module.1} parent=1 // pred_region
      %37 = dma.done [#allocation6], 2944
    $region17: #{observation_module.1} parent=1 // pred_fallthru
      _
    %v39 = vld [vmem:[#allocation2] sm:$0xff]
    %v40 = vpack.c.bf16 %v39, %v39
    %v41 = vld [vmem:[#allocation5] sm:$0xf]
    %v42 = vld [vmem:[#allocation5 + $0x4] sm:$0xf]
    %v43 = vld [vmem:[#allocation5 + $0x8] sm:$0xf]
    %v44 = vld [vmem:[#allocation5 + $0xc] sm:$0xf]
    %v45 = vld [vmem:[#allocation5 + $0x10] sm:$0xf]
    %v46 = vld [vmem:[#allocation5 + $0x14] sm:$0xf]
    %v47 = vld [vmem:[#allocation5 + $0x18] sm:$0xf]
    %v48 = vld [vmem:[#allocation5 + $0x1c] sm:$0xf]
    %v49 = vld [vmem:[#allocation5 + $0x20] sm:$0xf]
    %v50 = vld [vmem:[#allocation5 + $0x24] sm:$0xf]
    %v51 = vld [vmem:[#allocation5 + $0x28] sm:$0xf]
    %v52 = vld [vmem:[#allocation5 + $0x2c] sm:$0xf]
    %v53 = vld [vmem:[#allocation5 + $0x30] sm:$0xf]
    %v54 = vld [vmem:[#allocation5 + $0x34] sm:$0xf]
    %v55 = vld [vmem:[#allocation5 + $0x38] sm:$0xf]
    %v56 = vld [vmem:[#allocation5 + $0x3c] sm:$0xf]
    %v57 = vld [vmem:[#allocation5 + $0x40] sm:$0xf]
    %v58 = vld [vmem:[#allocation5 + $0x44] sm:$0xf]
    %v59 = vld [vmem:[#allocation5 + $0x48] sm:$0xf]
    %v60 = vld [vmem:[#allocation5 + $0x4c] sm:$0xf]
    %v61 = vld [vmem:[#allocation5 + $0x50] sm:$0xf]
    %v62 = vld [vmem:[#allocation5 + $0x54] sm:$0xf]
    %v63 = vld [vmem:[#allocation5 + $0x58] sm:$0xf]
    %v64 = vld [vmem:[#allocation5 + $0x5c] sm:$0xf]
    %v65 = vld [vmem:[#allocation5 + $0x60] sm:$0xf]
    %v66 = vld [vmem:[#allocation5 + $0x64] sm:$0xf]
    %v67 = vld [vmem:[#allocation5 + $0x68] sm:$0xf]
    %v68 = vld [vmem:[#allocation5 + $0x6c] sm:$0xf]
    %v69 = vld [vmem:[#allocation5 + $0x70] sm:$0xf]
    %v70 = vld [vmem:[#allocation5 + $0x74] sm:$0xf]
    %v71 = vld [vmem:[#allocation5 + $0x78] sm:$0xf]
    %v72 = vld [vmem:[#allocation5 + $0x7c] sm:$0xf]
    %v73 = vld [vmem:[#allocation5 + $0x80] sm:$0xf]
    %v74 = vld [vmem:[#allocation5 + $0x84] sm:$0xf]
    %v75 = vld [vmem:[#allocation5 + $0x88] sm:$0xf]
    %v76 = vld [vmem:[#allocation5 + $0x8c] sm:$0xf]
    %v77 = vld [vmem:[#allocation5 + $0x90] sm:$0xf]
    %v78 = vld [vmem:[#allocation5 + $0x94] sm:$0xf]
    %v79 = vld [vmem:[#allocation5 + $0x98] sm:$0xf]
    %v80 = vld [vmem:[#allocation5 + $0x9c] sm:$0xf]
    %v81 = vld [vmem:[#allocation5 + $0xa0] sm:$0x1]
    %v82 = vunpack.c.l.bf16 %v81
    %v83 = vld [vmem:[#allocation5 + $0xa8] sm:$0x1]
    %v84 = vunpack.c.l.bf16 %v83
    %v85 = vld [vmem:[#allocation5 + $0xb0] sm:$0x1]
    %v86 = vunpack.c.l.bf16 %v85
    %v87 = vlaneseq
    %v88 = vshrl.u32 %v87, 7
    %v89 = vsub.s32 0, %v88
    %v90 = vrot.slane %v82, %v89
    %v99 = vunpack.c.l.b16 %v41
    %v100 = vunpack.c.l.b16 %v42
    %v101 = vunpack.c.l.b16 %v43
    %v102 = vunpack.c.l.b16 %v44
    %v103 = vunpack.c.l.b16 %v45
    %v104 = vunpack.c.l.b16 %v46
    %v105 = vunpack.c.l.b16 %v47
    %v106 = vunpack.c.l.b16 %v48
    %v107 = vpack.c.b16 %v100, %v99
    %v108 = vpack.c.b16 %v102, %v101
    %v109 = vpack.c.b16 %v104, %v103
    %v110 = vpack.c.b16 %v106, %v105
    %vm115 = vcmask 523264
    %v117 = vsel %vm115, %v40, 0
    %119 = vmatprep.subr.bf16.mxu0 0
    %120 = vmatpush1.bf16.msra.mxu0 %v107
    %121 = vmatprep.subr.bf16.mxu0 0
    %122 = vmatpush1.bf16.msra.mxu0 %v108
    %123 = vmatprep.subr.bf16.mxu0 0
    %124 = vmatpush1.bf16.msra.mxu0 %v109
    %125 = vmatprep.subr.bf16.mxu0 0
    %126 = vmatpush1.bf16.msra.mxu0 %v110
    %127 = vmatprep.subr.bf16.mxu0 0
    %128 = vmatpush1.bf16.msra.mxu0 0
    %129 = vmatprep.subr.bf16.mxu0 0
    %130 = vmatpush1.bf16.msra.mxu0 0
    %131 = vmatprep.subr.bf16.mxu0 0
    %132 = vmatpush1.bf16.msra.mxu0 0
    %133 = vmatprep.subr.bf16.mxu0 0
    %134 = vmatpush1.bf16.msra.mxu0 0
    %135 = vmatprep.subr.bf16.mxu0 0
    %136 = vmatpush1.bf16.msra.mxu0 0
    %137 = vmatprep.subr.bf16.mxu0 0
    %138 = vmatpush1.bf16.msra.mxu0 0
    %139 = vmatprep.subr.bf16.mxu0 0
    %140 = vmatpush1.bf16.msra.mxu0 0
    %141 = vmatprep.subr.bf16.mxu0 0
    %142 = vmatpush1.bf16.msra.mxu0 0
    %143 = vmatprep.subr.bf16.mxu0 0
    %144 = vmatpush1.bf16.msra.mxu0 0
    %145 = vmatprep.subr.bf16.mxu0 0
    %146 = vmatpush1.bf16.msra.mxu0 0
    %147 = vmatprep.subr.bf16.mxu0 0
    %148 = vmatpush1.bf16.msra.mxu0 0
    %149 = vmatprep.subr.bf16.mxu0 0
    %150 = vmatpush1.bf16.msra.mxu0 0
    %151 = vmatprep.mubr.bf16.mxu0 0
    %152 = vmatmul.mubr.bf16.gmra.mrb[0].mxu0 %v117
    %v153 = vpop.f32.mrb[0].mxu0
    %v154 = vadd.f32 %v90, %v153
    %v155 = vpop.f32.mrb[0].mxu0
    %v156 = vpop.f32.mrb[0].mxu0
    %v157 = vpop.f32.mrb[0].mxu0
    %158 = vdwg.mxu0
    %v159 = vmul.f32 %v154, 0.01
    %v160 = vmax.f32 %v154, %v159
    %v161 = vpack.c.bf16 %v160, %v160
    %v162 = vlaneseq
    %v163 = vshrl.u32 %v162, 7
    %v164 = vsub.s32 0, %v163
    %v165 = vrot.slane %v84, %v164
    %v182 = vunpack.c.l.b16 %v49
    %v183 = vunpack.c.l.b16 %v50
    %v184 = vunpack.c.l.b16 %v51
    %v185 = vunpack.c.l.b16 %v52
    %v186 = vunpack.c.l.b16 %v53
    %v187 = vunpack.c.l.b16 %v54
    %v188 = vunpack.c.l.b16 %v55
    %v189 = vunpack.c.l.b16 %v56
    %v190 = vunpack.c.l.b16 %v57
    %v191 = vunpack.c.l.b16 %v58
    %v192 = vunpack.c.l.b16 %v59
    %v193 = vunpack.c.l.b16 %v60
    %v194 = vunpack.c.l.b16 %v61
    %v195 = vunpack.c.l.b16 %v62
    %v196 = vunpack.c.l.b16 %v63
    %v197 = vunpack.c.l.b16 %v64
    %v198 = vpack.c.b16 %v183, %v182
    %v199 = vpack.c.b16 %v185, %v184
    %v200 = vpack.c.b16 %v187, %v186
    %v201 = vpack.c.b16 %v189, %v188
    %v202 = vpack.c.b16 %v191, %v190
    %v203 = vpack.c.b16 %v193, %v192
    %v204 = vpack.c.b16 %v195, %v194
    %v205 = vpack.c.b16 %v197, %v196
    %214 = vmatprep.subr.bf16.mxu0 0
    %215 = vmatpush1.bf16.msra.mxu0 %v198
    %216 = vmatprep.subr.bf16.mxu0 0
    %217 = vmatpush1.bf16.msra.mxu0 %v199
    %218 = vmatprep.subr.bf16.mxu0 0
    %219 = vmatpush1.bf16.msra.mxu0 %v200
    %220 = vmatprep.subr.bf16.mxu0 0
    %221 = vmatpush1.bf16.msra.mxu0 %v201
    %222 = vmatprep.subr.bf16.mxu0 0
    %223 = vmatpush1.bf16.msra.mxu0 %v202
    %224 = vmatprep.subr.bf16.mxu0 0
    %225 = vmatpush1.bf16.msra.mxu0 %v203
    %226 = vmatprep.subr.bf16.mxu0 0
    %227 = vmatpush1.bf16.msra.mxu0 %v204
    %228 = vmatprep.subr.bf16.mxu0 0
    %229 = vmatpush1.bf16.msra.mxu0 %v205
    %230 = vmatprep.subr.bf16.mxu0 0
    %231 = vmatpush1.bf16.msra.mxu0 0
    %232 = vmatprep.subr.bf16.mxu0 0
    %233 = vmatpush1.bf16.msra.mxu0 0
    %234 = vmatprep.subr.bf16.mxu0 0
    %235 = vmatpush1.bf16.msra.mxu0 0
    %236 = vmatprep.subr.bf16.mxu0 0
    %237 = vmatpush1.bf16.msra.mxu0 0
    %238 = vmatprep.subr.bf16.mxu0 0
    %239 = vmatpush1.bf16.msra.mxu0 0
    %240 = vmatprep.subr.bf16.mxu0 0
    %241 = vmatpush1.bf16.msra.mxu0 0
    %242 = vmatprep.subr.bf16.mxu0 0
    %243 = vmatpush1.bf16.msra.mxu0 0
    %244 = vmatprep.subr.bf16.mxu0 0
    %245 = vmatpush1.bf16.msra.mxu0 0
    %246 = vmatprep.mubr.bf16.mxu0 0
    %247 = vmatmul.mubr.bf16.gmra.mrb[0].mxu0 %v161
    %v248 = vpop.f32.mrb[0].mxu0
    %v249 = vadd.f32 %v165, %v248
    %v250 = vpop.f32.mrb[0].mxu0
    %v251 = vpop.f32.mrb[0].mxu0
    %v252 = vpop.f32.mrb[0].mxu0
    %253 = vdwg.mxu0
    %v254 = vmul.f32 %v249, 0.01
    %v255 = vmax.f32 %v249, %v254
    %v256 = vpack.c.bf16 %v255, %v255
    %v257 = vlaneseq
    %v258 = vshrl.u32 %v257, 7
    %v259 = vsub.s32 0, %v258
    %v260 = vrot.slane %v86, %v259
    %v277 = vunpack.c.l.b16 %v65
    %v278 = vunpack.c.l.b16 %v66
    %v279 = vunpack.c.l.b16 %v67
    %v280 = vunpack.c.l.b16 %v68
    %v281 = vunpack.c.l.b16 %v69
    %v282 = vunpack.c.l.b16 %v70
    %v283 = vunpack.c.l.b16 %v71
    %v284 = vunpack.c.l.b16 %v72
    %v285 = vunpack.c.l.b16 %v73
    %v286 = vunpack.c.l.b16 %v74
    %v287 = vunpack.c.l.b16 %v75
    %v288 = vunpack.c.l.b16 %v76
    %v289 = vunpack.c.l.b16 %v77
    %v290 = vunpack.c.l.b16 %v78
    %v291 = vunpack.c.l.b16 %v79
    %v292 = vunpack.c.l.b16 %v80
    %v293 = vpack.c.b16 %v278, %v277
    %v294 = vpack.c.b16 %v280, %v279
    %v295 = vpack.c.b16 %v282, %v281
    %v296 = vpack.c.b16 %v284, %v283
    %v297 = vpack.c.b16 %v286, %v285
    %v298 = vpack.c.b16 %v288, %v287
    %v299 = vpack.c.b16 %v290, %v289
    %v300 = vpack.c.b16 %v292, %v291
    %309 = vmatprep.subr.bf16.mxu0 0
    %310 = vmatpush1.bf16.msra.mxu0 %v293
    %311 = vmatprep.subr.bf16.mxu0 0
    %312 = vmatpush1.bf16.msra.mxu0 %v294
    %313 = vmatprep.subr.bf16.mxu0 0
    %314 = vmatpush1.bf16.msra.mxu0 %v295
    %315 = vmatprep.subr.bf16.mxu0 0
    %316 = vmatpush1.bf16.msra.mxu0 %v296
    %317 = vmatprep.subr.bf16.mxu0 0
    %318 = vmatpush1.bf16.msra.mxu0 %v297
    %319 = vmatprep.subr.bf16.mxu0 0
    %320 = vmatpush1.bf16.msra.mxu0 %v298
    %321 = vmatprep.subr.bf16.mxu0 0
    %322 = vmatpush1.bf16.msra.mxu0 %v299
    %323 = vmatprep.subr.bf16.mxu0 0
    %324 = vmatpush1.bf16.msra.mxu0 %v300
    %325 = vmatprep.subr.bf16.mxu0 0
    %326 = vmatpush1.bf16.msra.mxu0 0
    %327 = vmatprep.subr.bf16.mxu0 0
    %328 = vmatpush1.bf16.msra.mxu0 0
    %329 = vmatprep.subr.bf16.mxu0 0
    %330 = vmatpush1.bf16.msra.mxu0 0
    %331 = vmatprep.subr.bf16.mxu0 0
    %332 = vmatpush1.bf16.msra.mxu0 0
    %333 = vmatprep.subr.bf16.mxu0 0
    %334 = vmatpush1.bf16.msra.mxu0 0
    %335 = vmatprep.subr.bf16.mxu0 0
    %336 = vmatpush1.bf16.msra.mxu0 0
    %337 = vmatprep.subr.bf16.mxu0 0
    %338 = vmatpush1.bf16.msra.mxu0 0
    %339 = vmatprep.subr.bf16.mxu0 0
    %340 = vmatpush1.bf16.msra.mxu0 0
    %341 = vmatprep.mubr.bf16.mxu0 0
    %342 = vmatmul.mubr.bf16.gmra.mrb[0].mxu0 %v256
    %v343 = vpop.f32.mrb[0].mxu0
    %v344 = vadd.f32 %v260, %v343
    %v345 = vpop.f32.mrb[0].mxu0
    %v346 = vpop.f32.mrb[0].mxu0
    %v347 = vpop.f32.mrb[0].mxu0
    %348 = vdwg.mxu0
    %v349 = vmul.f32 %v344, 0.5
    %v350 = vtanh.pop %v349
    %v351 = vmul.f32 %v350, 0.5
    %v352 = vadd.f32 %v351, 0.5
    %vm353 = vcmask 261120
    %354 = vst.msk [vmem:[#allocation7] sm:$0xff] %vm353, %v352
    // Predicated region
    $region18: #{observation_module.1} parent=1 // pred_check
      _
    $region19: #{observation_module.1} parent=1 // pred_check_branch
      %356 = sbr.rel (0) target = $region21
    $region20: #{observation_module.1} parent=1 // pred_region
      %s358 = ssub.s32 128, 128
      %359 = vsyncadd [#allocation4], %s358
      %s361 = sshll.u32 [#allocation7], 4
      %s362 = int_to_ptr.vmem [resolvable:$true] %s361
      %364 = dma.vmem_to_hbm [thread:$0]  %s362, 128, %s2, [#allocation4]
    $region21: #{observation_module.1} parent=1 // pred_fallthru
      _
    // Predicated region
    $region22: #{observation_module.1} parent=1 // pred_check
      _
    $region23: #{observation_module.1} parent=1 // pred_check_branch
      %366 = sbr.rel (0) target = $region25
    $region24: #{observation_module.1} parent=1 // pred_region
      %367 = dma.done [#allocation4], 128
    $region25: #{observation_module.1} parent=1 // pred_fallthru
      _
    %368 = vsyncpa [#allocation3], 1
    %369 = vsyncpa [#allocation6], 1
    %370 = vsyncpa [#allocation4], 1

</llo_original>
